<compile_context>
chip_gen: v7x
topology: tpu7x:2x2x1
jax: 0.10.0
libtpu: 0.0.40
codegen_flags: <defaults>
</compile_context>

<pallas_src>
import numpy as np
import jax
import jax.numpy as jnp
from jax.experimental import pallas as pl
from jax.experimental.pallas import tpu as pltpu


# ----------------------------------------------------------------------------
# sincos positional embedding (setup glue, numpy — matches the torch reference)
# ----------------------------------------------------------------------------
def _get_1d_sincos_pos_embed_from_grid(embed_dim, pos):
    omega = np.arange(embed_dim // 2, dtype=np.float64)
    omega /= embed_dim / 2.0
    omega = 1.0 / 10000.0 ** omega            # (D/2,)
    pos = pos.reshape(-1).astype(np.float64)  # (M,)
    out = np.einsum("m,d->md", pos, omega)    # (M, D/2)
    return np.concatenate([np.sin(out), np.cos(out)], axis=1)  # (M, D)


def get_2d_sincos_pos_embed(embed_dim, grid_size, base_size, interpolation_scale=1.0):
    if isinstance(grid_size, int):
        grid_size = (grid_size, grid_size)
    if isinstance(base_size, int):
        base_size = (base_size, base_size)
    grid_h = np.arange(grid_size[0], dtype=np.float32) / (grid_size[0] / base_size[0]) / interpolation_scale
    grid_w = np.arange(grid_size[1], dtype=np.float32) / (grid_size[1] / base_size[1]) / interpolation_scale
    grid = np.meshgrid(grid_w, grid_h)            # [w-coords, h-coords]
    grid = np.stack(grid, axis=0)                 # (2, gh, gw)
    grid = grid.reshape([2, 1, grid_size[0], grid_size[1]])
    emb_h = _get_1d_sincos_pos_embed_from_grid(embed_dim // 2, grid[0])
    emb_w = _get_1d_sincos_pos_embed_from_grid(embed_dim // 2, grid[1])
    return np.concatenate([emb_h, emb_w], axis=1).astype(np.float32)  # (gh*gw, D)


# ----------------------------------------------------------------------------
# Pallas kernel: row-tile patch projection + bias (+ optional LN) + pos-embed
# ----------------------------------------------------------------------------
def _patch_embed_kernel(layer_norm):
    def kernel(p_ref, w_ref, b_ref, pe_ref, o_ref):
        # p_ref : (1, TILE_N, K)  row tile of patches for one batch element
        # w_ref : (K, D)          projection weight (grid-invariant)
        # b_ref : (1, D)          bias               (grid-invariant, f32)
        # pe_ref: (TILE_N, D)     positional-embedding row tile (batch-invariant)
        # o_ref : (1, TILE_N, D)  output row tile
        acc = jnp.dot(p_ref[0], w_ref[...], preferred_element_type=jnp.float32)
        acc = acc + b_ref[...]                                # (1, D) f32 broadcast
        if layer_norm:
            # Two-pass (centered) variance in f32: after the bias add the mean
            # can dominate the std, so E[x^2]-E[x]^2 risks cancellation.
            # No gamma/beta: the module uses elementwise_affine=False.
            mean = jnp.mean(acc, axis=-1, keepdims=True)
            centered = acc - mean
            var = jnp.mean(centered * centered, axis=-1, keepdims=True)
            acc = centered * jax.lax.rsqrt(var + 1e-6)
        acc = acc + pe_ref[...].astype(jnp.float32)
        # For real DiT configs D % 128 == 0 -> full-lane stores; tiny demo D
        # falls back to masked partial vst, which is fine at this size.
        o_ref[0] = acc.astype(o_ref.dtype)
    return kernel


# ----------------------------------------------------------------------------
# Tiling helpers
# ----------------------------------------------------------------------------
def _vmem_budget_bytes():
    """~55% of physical VMEM (generation-aware: 128 MiB on v5e/v6e, 64 MiB on
    v7x), leaving headroom for Mosaic's internal scratch."""
    cap = 128 * 2**20
    try:
        # Pure hardware query; a failure here must not change kernel semantics,
        # so fall back to the conservative 128 MiB default silently.
        cap = int(getattr(pltpu.get_tpu_info(), "vmem_capacity_bytes", cap))
    except Exception:
        pass
    return int(cap * 0.55)


def _pick_row_tile(n, batch, max_rows, target=512, min_steps=8):
    """Pick a row tile that (a) is a legal block (multiple of 8 dividing n, or
    the full dim), (b) fits the VMEM budget (max_rows), (c) is MXU-edge
    friendly (multiple of 256, else 128), and (d) gives the grid enough total
    steps (>= min_steps) for pipelining and v7x's two TensorCores."""
    max_rows = max(1, min(max_rows, n))
    cands = []
    if n <= max_rows:
        cands.append(n)                           # full second-minor dim: always legal
    upper = min(target, max_rows)
    for t in range((upper // 8) * 8, 7, -8):      # multiples of 8 only
        if n % t == 0:
            cands.append(t)
    if not cands:
        return n                                  # fall back to full dim
    # Keep rows-per-step >= 128 when possible so per-step overhead stays amortized.
    big = [t for t in cands if t >= 128 or t == n]
    pool = big if big else cands

    def score(t):
        steps = batch * (n // t)
        return (steps >= min_steps,               # enough steps for 2 TCs / pipeline
                1 if (t % 256 == 0 or t == n) else 0,   # v6e/v7x 256-edge MXU
                1 if t % 128 == 0 else 0,               # v5e 128-edge MXU
                t)                                # then biggest tile
    return max(pool, key=score)


# ----------------------------------------------------------------------------
# pallas_call builder
# ----------------------------------------------------------------------------
def _build_patch_embed_call(B, N, K, D, tile_n, operand_dtype, out_dtype,
                            layer_norm, vmem_budget, fuse_patchify):
    n_row_tiles = N // tile_n
    ib = jnp.dtype(operand_dtype).itemsize
    ob = jnp.dtype(out_dtype).itemsize

    # Per-step VMEM footprint.  The 2x factors ARE the double buffers — do not
    # multiply again when deriving the limit.
    step_bytes = (2 * tile_n * K * ib        # patches row tile
                  + 2 * tile_n * D * ob      # output row tile
                  + 2 * tile_n * D * ib      # pos-embed row tile
                  + 2 * K * D * ib           # weight (grid-invariant)
                  + 2 * D * 4)               # bias   (grid-invariant, f32)
    vmem_limit = int(min(vmem_budget, max(step_bytes + (2 << 20), 16 * 2**20)))

    cost = pl.CostEstimate(
        flops=2 * B * N * K * D,
        transcendentals=(B * N) if layer_norm else 0,
        bytes_accessed=(B * N * K * ib        # patches streamed once
                        + K * D * ib + D * 4  # weight + bias, once
                        + N * D * ib          # pos-embed, once (batch-invariant)
                        + B * N * D * ob),    # output
    )

    compiler_params = pltpu.CompilerParams(
        dimension_semantics=("parallel", "parallel"),
        vmem_limit_bytes=vmem_limit,
        # Let XLA fuse the patchify reshape/transpose/cast chain into the
        # patches operand (operand 0) when the forward is jitted.
        allow_input_fusion=[True, False, False, False] if fuse_patchify else None,
    )

    # Grid: row tiles OUTER, batch INNER, so the pos-embed block index is
    # unchanged across the inner loop and is not re-DMA'd per batch element.
    return pl.pallas_call(
        _patch_embed_kernel(layer_norm),
        out_shape=jax.ShapeDtypeStruct((B, N, D), out_dtype),
        grid_spec=pltpu.PrefetchScalarGridSpec(
            num_scalar_prefetch=0,
            grid=(n_row_tiles, B),
            in_specs=[
                pl.BlockSpec((1, tile_n, K), lambda n, b: (b, n, 0)),   # patches
                pl.BlockSpec((K, D), lambda n, b: (0, 0)),              # weight (resident)
                pl.BlockSpec((1, D), lambda n, b: (0, 0)),              # bias   (resident)
                pl.BlockSpec((tile_n, D), lambda n, b: (n, 0)),         # pos (batch-invariant)
            ],
            out_specs=pl.BlockSpec((1, tile_n, D), lambda n, b: (b, n, 0)),
        ),
        compiler_params=compiler_params,
        cost_estimate=cost,
    )


def patch_embed_forward(latent, weight, bias, pos_embed, patch_size,
                        layer_norm=False, matmul_dtype=None, row_tile=512,
                        fuse_patchify=True):
    """latent: (B, C, H, W) NCHW; weight: (D, C, p, p); bias: (D,); pos_embed: (N, D).

    MXU operand dtype defaults to the latent dtype (bf16 models automatically
    stream bf16 operands); set matmul_dtype=jnp.bfloat16 to force it for f32
    inputs.  Accumulation and post-matmul math are always f32 in-kernel.
    """
    B, C, H, W = latent.shape
    D = weight.shape[0]
    p = patch_size
    nH, nW = H // p, W // p
    N = nH * nW
    K = C * p * p

    out_dtype = latent.dtype
    operand_dtype = jnp.dtype(matmul_dtype) if matmul_dtype is not None else jnp.dtype(latent.dtype)

    # --- glue: patchify, (c, kh, kw)-ordered to match Conv2d weight layout ---
    # Cast BEFORE the transpose so the materialized patches buffer is already
    # the (possibly narrower) operand dtype; allow_input_fusion lets XLA fuse
    # this chain into the pallas_call operand under jit.
    # TODO(synk): fully removing this extra HBM pass needs an in-kernel NCHW
    # relayout (strided sublane/lane gathers per patch row), which risks Mosaic
    # lowering for small p/C; deliberately not done here.
    lat = latent.astype(operand_dtype)
    patches = lat.reshape(B, C, nH, p, nW, p)
    patches = jnp.transpose(patches, (0, 2, 4, 1, 3, 5)).reshape(B, N, K)

    w_kd = weight.reshape(D, K).T.astype(operand_dtype)       # (K, D)
    b_2d = bias.reshape(1, D).astype(jnp.float32)
    pe = pos_embed.astype(operand_dtype)                      # added in f32 in-kernel

    # VMEM-budget-aware row tile.
    budget = _vmem_budget_bytes()
    ib = jnp.dtype(operand_dtype).itemsize
    ob = jnp.dtype(out_dtype).itemsize
    fixed = 2 * K * D * ib + 2 * D * 4 + (2 << 20)            # weight + bias + headroom
    per_row = 2 * (K * ib + D * ob + D * ib)                  # patches + out + pos per row
    max_rows = max(8, (budget - fixed) // max(per_row, 1))
    tile_n = _pick_row_tile(N, B, max_rows, target=row_tile)

    fn = _build_patch_embed_call(B, N, K, D, tile_n, operand_dtype, out_dtype,
                                 layer_norm, budget, fuse_patchify)
    return fn(patches, w_kd, b_2d, pe)


# ----------------------------------------------------------------------------
# Pure-JAX reference for a sanity check
# ----------------------------------------------------------------------------
def patch_embed_reference(latent, weight, bias, pos_embed, patch_size, layer_norm=False):
    out = jax.lax.conv_general_dilated(
        latent, weight,
        window_strides=(patch_size, patch_size), padding="VALID",
        dimension_numbers=("NCHW", "OIHW", "NCHW"),
    ) + bias.reshape(1, -1, 1, 1)
    B, D, nH, nW = out.shape
    out = out.reshape(B, D, nH * nW).transpose(0, 2, 1)       # flatten(2).transpose(1,2)
    if layer_norm:
        mean = jnp.mean(out, axis=-1, keepdims=True)
        var = jnp.mean((out - mean) ** 2, axis=-1, keepdims=True)
        out = (out - mean) / jnp.sqrt(var + 1e-6)
    return (out + pos_embed[None]).astype(latent.dtype)


if __name__ == "__main__":
    # Small config consistent with the module: height=width=16, patch_size=8,
    # in_channels=4, embed_dim=32  ->  N = 2*2 = 4 patches, K = 4*8*8 = 256.
    B, C, H, W = 2, 4, 16, 16
    patch_size = 8
    embed_dim = 32
    nH, nW = H // patch_size, W // patch_size

    key = jax.random.PRNGKey(0)
    k_x, k_w, k_b = jax.random.split(key, 3)

    latent = jax.random.normal(k_x, (B, C, H, W), dtype=jnp.float32)

    # Deterministic Conv2d(in_channels, embed_dim, k=p, stride=p, bias=True) params.
    fan_in = C * patch_size * patch_size
    bound = 1.0 / np.sqrt(fan_in)
    weight = jax.random.uniform(k_w, (embed_dim, C, patch_size, patch_size),
                                dtype=jnp.float32, minval=-bound, maxval=bound)
    bias = jax.random.uniform(k_b, (embed_dim,), dtype=jnp.float32,
                              minval=-bound, maxval=bound)

    # Fixed sincos pos embed (base_size == grid size, as in __init__).
    pos_embed_np = get_2d_sincos_pos_embed(embed_dim, (nH, nW), base_size=(nH, nW),
                                           interpolation_scale=1.0)
    pos_embed = jnp.asarray(pos_embed_np)                     # (N, D)

    # TODO(synk): the torch forward recomputes pos_embed host-side when the
    # runtime H/W differ from __init__; shapes always match here.

    # Jit the forward so the patchify chain is visible to XLA's input fusion.
    fwd = jax.jit(patch_embed_forward, static_argnames=("patch_size", "layer_norm"))

    out = fwd(latent, weight, bias, pos_embed, patch_size=patch_size, layer_norm=False)
    out = jax.block_until_ready(out)
    ref = patch_embed_reference(latent, weight, bias, pos_embed, patch_size,
                                layer_norm=False)
    np.testing.assert_allclose(np.asarray(out), np.asarray(ref), rtol=1e-5, atol=1e-5)

    out_ln = fwd(latent, weight, bias, pos_embed, patch_size=patch_size, layer_norm=True)
    out_ln = jax.block_until_ready(out_ln)
    ref_ln = patch_embed_reference(latent, weight, bias, pos_embed, patch_size,
                                   layer_norm=True)
    np.testing.assert_allclose(np.asarray(out_ln), np.asarray(ref_ln),
                               rtol=1e-4, atol=1e-4)

    print("KERNEL_OK")
</pallas_src>

<mosaic_0001>
module attributes {stable_mosaic.version = 11 : i64} {
  func.func @kernel(%arg0: i32, %arg1: i32, %arg2: memref<1x4x256xf32, #tpu.memory_space<vmem>>, %arg3: memref<256x32xf32, #tpu.memory_space<vmem>>, %arg4: memref<1x32xf32, #tpu.memory_space<vmem>>, %arg5: memref<4x32xf32, #tpu.memory_space<vmem>>, %arg6: memref<1x4x32xf32, #tpu.memory_space<vmem>>) attributes {dimension_semantics = [#tpu.dimension_semantics<parallel>, #tpu.dimension_semantics<parallel>], iteration_bounds = array<i64: 1, 2>, scalar_prefetch = 0 : i64, scratch_operands = 0 : i64, tpu.core_type = #tpu.core_type<tc>, window_params = [{transform_indices = @transform_0, window_bounds = array<i64: 1, 4, 256>}, {pipeline_mode = #tpu.pipeline_mode<synchronous>, transform_indices = @transform_1, window_bounds = array<i64: 256, 32>}, {pipeline_mode = #tpu.pipeline_mode<synchronous>, transform_indices = @transform_2, window_bounds = array<i64: 1, 32>}, {transform_indices = @transform_3, window_bounds = array<i64: 4, 32>}, {transform_indices = @transform_4, window_bounds = array<i64: 1, 4, 32>}]} {
    %c0 = arith.constant 0 : index
    %c0_0 = arith.constant 0 : index
    %c0_1 = arith.constant 0 : index
    %0 = vector.load %arg2[%c0, %c0_0, %c0_1] : memref<1x4x256xf32, #tpu.memory_space<vmem>>, vector<1x4x256xf32>
    %1 = vector.shape_cast %0 : vector<1x4x256xf32> to vector<4x256xf32>
    %c0_2 = arith.constant 0 : index
    %c0_3 = arith.constant 0 : index
    %2 = vector.load %arg3[%c0_2, %c0_3] : memref<256x32xf32, #tpu.memory_space<vmem>>, vector<256x32xf32>
    %cst = arith.constant dense<0.000000e+00> : vector<4x32xf32>
    %3 = tpu.matmul %1, %2, %cst {dimension_numbers = #tpu.dot_dimension_numbers<[1], [0], [0], [1], [0, 0, 1, 1], [], []>} : vector<4x256xf32>, vector<256x32xf32>, vector<4x32xf32> -> vector<4x32xf32>
    %c0_4 = arith.constant 0 : index
    %c0_5 = arith.constant 0 : index
    %4 = vector.load %arg4[%c0_4, %c0_5] : memref<1x32xf32, #tpu.memory_space<vmem>>, vector<1x32xf32>
    %5 = vector.broadcast %4 : vector<1x32xf32> to vector<4x32xf32>
    %6 = arith.addf %3, %5 : vector<4x32xf32>
    %c0_6 = arith.constant 0 : index
    %c0_7 = arith.constant 0 : index
    %7 = vector.load %arg5[%c0_6, %c0_7] : memref<4x32xf32, #tpu.memory_space<vmem>>, vector<4x32xf32>
    %8 = arith.addf %6, %7 : vector<4x32xf32>
    %c0_8 = arith.constant 0 : index
    %c0_9 = arith.constant 0 : index
    %c0_10 = arith.constant 0 : index
    %9 = vector.load %arg6[%c0_8, %c0_9, %c0_10] : memref<1x4x32xf32, #tpu.memory_space<vmem>>, vector<1x4x32xf32>
    %10 = vector.shape_cast %9 : vector<1x4x32xf32> to vector<4x32xf32>
    %11 = vector.shape_cast %8 : vector<4x32xf32> to vector<1x4x32xf32>
    tpu.vector_store %arg6[%c0_8, %c0_9, %c0_10], %11 {strides = array<i32>} : memref<1x4x32xf32, #tpu.memory_space<vmem>>, vector<1x4x32xf32>,
    return
  }
  func.func @transform_0(%arg0: i32, %arg1: i32) -> (i32, i32, i32) {
    %c0_i32 = arith.constant 0 : i32
    %c0_i32_0 = arith.constant 0 : i32
    return %arg1, %arg0, %c0_i32 : i32, i32, i32
  }
  func.func @transform_1(%arg0: i32, %arg1: i32) -> (i32, i32) {
    %c0_i32 = arith.constant 0 : i32
    %c0_i32_0 = arith.constant 0 : i32
    %c0_i32_1 = arith.constant 0 : i32
    return %c0_i32, %c0_i32_0 : i32, i32
  }
  func.func @transform_2(%arg0: i32, %arg1: i32) -> (i32, i32) {
    %c0_i32 = arith.constant 0 : i32
    %c0_i32_0 = arith.constant 0 : i32
    %c0_i32_1 = arith.constant 0 : i32
    return %c0_i32, %c0_i32_0 : i32, i32
  }
  func.func @transform_3(%arg0: i32, %arg1: i32) -> (i32, i32) {
    %c0_i32 = arith.constant 0 : i32
    %c0_i32_0 = arith.constant 0 : i32
    return %arg0, %c0_i32 : i32, i32
  }
  func.func @transform_4(%arg0: i32, %arg1: i32) -> (i32, i32, i32) {
    %c0_i32 = arith.constant 0 : i32
    %c0_i32_0 = arith.constant 0 : i32
    return %arg1, %arg0, %c0_i32 : i32, i32, i32
  }
}

</mosaic_0001>

<llo_original>
// kernel: patch_embed_forward.1
$region0: #{patch_embed_forward.1}
  #allocation0 [shape = 'u32[]', space=smem, size = 0x4, offset = 0x4, fixed_abs, tag = 'smem constant byte address 0x4 - core index']
  #allocation1 [shape = 'u32[144,128]{1,0:T(1,128)}', space=vmem, size = 0x12000, scoped, tag = 'internal scratch']
  %s0 = inlined_call_operand.vmem [shape: f32[2,4,256], index: 0, kind: input, shape index: {}]
  %s1 = inlined_call_operand.vmem [shape: f32[256,32], index: 1, kind: input, shape index: {}]
  %s2 = inlined_call_operand.vmem [shape: f32[1,32], index: 2, kind: input, shape index: {}]
  %s3 = inlined_call_operand.vmem [shape: f32[4,32], index: 3, kind: input, shape index: {}]
  %s4 = inlined_call_operand.hbm [shape: f32[2,4,32], index: 4, kind: output, shape index: {}]
  %s5 = sld [smem:[#allocation0]]
  $region49: #{patch_embed_forward.1} parent=0
    _
  %s7 = ssub.s32 1, %s5
  %s8 = scalar_select 0, %s7, %s5
  $region1: #{patch_embed_forward.1} parent=0
    #allocation2 [shape = 'u8[4096]{0}', space=vmem, size = 0x1000, scoped, tag = 'output window, operand 0']
    #allocation3 [shape = 's32[2]{0}', space=sflag, size = 0x8, scoped, tag = 'scoped memory for patch_embed_forward.1']
    %9 = vsyncpa [#allocation3], 0
    %s10 = scalar_lea.sflag [#allocation3], 1
    %11 = vsyncpa %s10, 0
    loop: start=0, step=1, limit=4
    $region2: #{patch_embed_forward.1} parent=1 // loop_pre_header
      _
    $region3: #{patch_embed_forward.1} parent=1 // loop_header
      %s13 = sphi 0, %s17
      %p14 = scmp.ge.s32.totalorder %s13, 4
      %s20 = sphi 0, %s32
      %s21 = sphi 0, %s28
      %s22 = sphi 0, %s20
      %s23 = sphi 0, %s21
      %s24 = sphi 0, %s22
      %s25 = sphi 0, %s23
      %s37 = sphi 0, %s39
      %s40 = sphi 0, %s37
      %s41 = sphi 0, %s40
      %s57 = sphi 0, %s41
      %s61 = sphi 0, %s61
      %s63 = sphi 0, %s61
      %s64 = sphi 0, %s63
      %s78 = sphi 0, %s64
      %s82 = sphi 0, %s82
      %s84 = sphi 0, %s82
      %s85 = sphi 0, %s84
      %s99 = sphi 0, %s85
      %s105 = sphi 0, %s107
      %s108 = sphi 0, %s105
      %s109 = sphi 0, %s108
      %s125 = sphi 0, %s109
      %s133 = sphi 0, %s135
      %s136 = sphi 0, %s133
      %s137 = sphi 0, %s136
      %s153 = sphi 0, %s137
    $region4: #{patch_embed_forward.1} parent=1 // loop_header_branch
      %16 = sbr.rel (%p14) target = $region8
    $region5: #{patch_embed_forward.1} parent=1 // loop_body
      %s18 = ssub.s32 %s13, 1
      %s19 = ssub.s32 %s13, 2
      %s26 = sadd.s32 1, %s21
      %p27 = scmp.ge.s32.totalorder %s26, 2
      %s28 = scalar_select %p27, 0, %s26
      %s29 = sadd.s32 1, %s20
      %s30 = scalar_select %p27, %s29, %s20
      %p31 = scmp.ge.s32.totalorder %s30, 1
      %s32 = scalar_select %p31, 0, %s30
      %s33 = ssub.s32 %s21, %s28
      %s34 = ssub.s32 %s20, %s32
      %s35 = sor.u32 %s33, %s34
      %p36 = scmp.eq.s32.totalorder %s35, 0
      %s38 = sadd.s32 %s37, 1
      %s39 = scalar_select %p36, %s37, %s38
      %p42 = pneg %p36
      %p43 = scmp.eq.s32.totalorder %s13, 1
      %p44 = por %p42, %p43
      %p45 = scmp.ne.s32.totalorder %s37, %s40
      %p46 = scmp.eq.s32.totalorder %s13, 0
      %p47 = por %p45, %p46
      %p48 = scmp.ne.s32.totalorder %s37, %s40
      %p49 = scmp.eq.s32.totalorder %s18, 1
      %p50 = por %p48, %p49
      %p51 = scmp.ne.s32.totalorder %s40, %s41
      %p52 = scmp.eq.s32.totalorder %s18, 0
      %p53 = por %p51, %p52
      %p54 = scmp.ne.s32.totalorder %s40, %s41
      %p55 = scmp.eq.s32.totalorder %s19, 1
      %p56 = por %p54, %p55
      %p58 = scmp.ne.s32.totalorder %s41, %s57
      %p59 = scmp.eq.s32.totalorder %s19, 0
      %p60 = por %p58, %p59
      %s62 = sadd.s32 %s61, 1
      %p65 = scmp.eq.s32.totalorder %s13, 1
      %p66 = scmp.ne.s32.totalorder %s61, %s63
      %p67 = scmp.eq.s32.totalorder %s13, 0
      %p68 = por %p66, %p67
      %p69 = scmp.ne.s32.totalorder %s61, %s63
      %p70 = scmp.eq.s32.totalorder %s18, 1
      %p71 = por %p69, %p70
      %p72 = scmp.ne.s32.totalorder %s63, %s64
      %p73 = scmp.eq.s32.totalorder %s18, 0
      %p74 = por %p72, %p73
      %p75 = scmp.ne.s32.totalorder %s63, %s64
      %p76 = scmp.eq.s32.totalorder %s19, 1
      %p77 = por %p75, %p76
      %p79 = scmp.ne.s32.totalorder %s64, %s78
      %p80 = scmp.eq.s32.totalorder %s19, 0
      %p81 = por %p79, %p80
      %s83 = sadd.s32 %s82, 1
      %p86 = scmp.eq.s32.totalorder %s13, 1
      %p87 = scmp.ne.s32.totalorder %s82, %s84
      %p88 = scmp.eq.s32.totalorder %s13, 0
      %p89 = por %p87, %p88
      %p90 = scmp.ne.s32.totalorder %s82, %s84
      %p91 = scmp.eq.s32.totalorder %s18, 1
      %p92 = por %p90, %p91
      %p93 = scmp.ne.s32.totalorder %s84, %s85
      %p94 = scmp.eq.s32.totalorder %s18, 0
      %p95 = por %p93, %p94
      %p96 = scmp.ne.s32.totalorder %s84, %s85
      %p97 = scmp.eq.s32.totalorder %s19, 1
      %p98 = por %p96, %p97
      %p100 = scmp.ne.s32.totalorder %s85, %s99
      %p101 = scmp.eq.s32.totalorder %s19, 0
      %p102 = por %p100, %p101
      %s103 = ssub.s32 %s20, %s32
      %p104 = scmp.eq.s32.totalorder %s103, 0
      %s106 = sadd.s32 %s105, 1
      %s107 = scalar_select %p104, %s105, %s106
      %p110 = pneg %p104
      %p111 = scmp.eq.s32.totalorder %s13, 1
      %p112 = por %p110, %p111
      %p113 = scmp.ne.s32.totalorder %s105, %s108
      %p114 = scmp.eq.s32.totalorder %s13, 0
      %p115 = por %p113, %p114
      %p116 = scmp.ne.s32.totalorder %s105, %s108
      %p117 = scmp.eq.s32.totalorder %s18, 1
      %p118 = por %p116, %p117
      %p119 = scmp.ne.s32.totalorder %s108, %s109
      %p120 = scmp.eq.s32.totalorder %s18, 0
      %p121 = por %p119, %p120
      %p122 = scmp.ne.s32.totalorder %s108, %s109
      %p123 = scmp.eq.s32.totalorder %s19, 1
      %p124 = por %p122, %p123
      %p126 = scmp.ne.s32.totalorder %s109, %s125
      %p127 = scmp.eq.s32.totalorder %s19, 0
      %p128 = por %p126, %p127
      %s129 = ssub.s32 %s21, %s28
      %s130 = ssub.s32 %s20, %s32
      %s131 = sor.u32 %s129, %s130
      %p132 = scmp.eq.s32.totalorder %s131, 0
      %s134 = sadd.s32 %s133, 1
      %s135 = scalar_select %p132, %s133, %s134
      %p138 = pneg %p132
      %p139 = scmp.eq.s32.totalorder %s13, 1
      %p140 = por %p138, %p139
      %p141 = scmp.ne.s32.totalorder %s133, %s136
      %p142 = scmp.eq.s32.totalorder %s13, 0
      %p143 = por %p141, %p142
      %p144 = scmp.ne.s32.totalorder %s133, %s136
      %p145 = scmp.eq.s32.totalorder %s18, 1
      %p146 = por %p144, %p145
      %p147 = scmp.ne.s32.totalorder %s136, %s137
      %p148 = scmp.eq.s32.totalorder %s18, 0
      %p149 = por %p147, %p148
      %p150 = scmp.ne.s32.totalorder %s136, %s137
      %p151 = scmp.eq.s32.totalorder %s19, 1
      %p152 = por %p150, %p151
      %p154 = scmp.ne.s32.totalorder %s137, %s153
      %p155 = scmp.eq.s32.totalorder %s19, 0
      %p156 = por %p154, %p155
      %p157 = scmp.le.s32.totalorder 1, %s13
      %p158 = scmp.lt.s32.totalorder %s13, 3
      %p159 = pnand %p157, %p158
      %p160 = pneg %p159
      // Predicated region
      $region9: #{patch_embed_forward.1} parent=5 // pred_check
        _
      $region10: #{patch_embed_forward.1} parent=5 // pred_check_branch
        %162 = sbr.rel (%p159) target = $region12
      $region11: #{patch_embed_forward.1} parent=5 // pred_region
        %s163 = ssub.s32 %s13, 1
        // Predicated region
        $region13: #{patch_embed_forward.1} parent=11 // pred_check
          %p164 = pneg %p74
        $region14: #{patch_embed_forward.1} parent=11 // pred_check_branch
          %166 = sbr.rel (%p164) target = $region16
        $region15: #{patch_embed_forward.1} parent=11 // pred_region
          _
        $region16: #{patch_embed_forward.1} parent=11 // pred_fallthru
          _
        // Predicated region
        $region17: #{patch_embed_forward.1} parent=11 // pred_check
          %p167 = pneg %p95
        $region18: #{patch_embed_forward.1} parent=11 // pred_check_branch
          %169 = sbr.rel (%p167) target = $region20
        $region19: #{patch_embed_forward.1} parent=11 // pred_region
          _
        $region20: #{patch_embed_forward.1} parent=11 // pred_fallthru
          _
        // Predicated region
        $region21: #{patch_embed_forward.1} parent=11 // pred_check
          %p170 = pneg %p121
        $region22: #{patch_embed_forward.1} parent=11 // pred_check_branch
          %172 = sbr.rel (%p170) target = $region24
        $region23: #{patch_embed_forward.1} parent=11 // pred_region
          %p173 = scmp.lt.s32.totalorder %s22, 0
          %s174 = scalar_select %p173, %s22, 0
          %s175 = smul.addr %s174, 4
          %s176 = scalar_lea.vmem %s3, %s175
        $region24: #{patch_embed_forward.1} parent=11 // pred_fallthru
          _
      $region12: #{patch_embed_forward.1} parent=5 // pred_fallthru
        _
      %p177 = scmp.lt.s32.totalorder %s13, 2
      // Predicated region
      $region25: #{patch_embed_forward.1} parent=5 // pred_check
        %p178 = pneg %p177
      $region26: #{patch_embed_forward.1} parent=5 // pred_check_branch
        %180 = sbr.rel (%p178) target = $region28
      $region27: #{patch_embed_forward.1} parent=5 // pred_region
        // Predicated region
        $region29: #{patch_embed_forward.1} parent=27 // pred_check
          %p181 = pneg %p47
        $region30: #{patch_embed_forward.1} parent=27 // pred_check_branch
          %183 = sbr.rel (%p181) target = $region32
        $region31: #{patch_embed_forward.1} parent=27 // pred_region
          %p184 = scmp.lt.s32.totalorder %s21, 1
          %s185 = scalar_select %p184, %s21, 1
          %p186 = scmp.lt.s32.totalorder %s20, 0
          %s187 = scalar_select %p186, %s20, 0
          %s188 = smul.addr %s187, 2
          %s189 = smul.addr %s185, 2
          %s190 = sadd.s32 %s188, %s189
          %s191 = smul.addr %s190, 4
          %s192 = scalar_lea.vmem %s0, %s191
        $region32: #{patch_embed_forward.1} parent=27 // pred_fallthru
          _
      $region28: #{patch_embed_forward.1} parent=5 // pred_fallthru
        _
      %p193 = scmp.le.s32.totalorder 1, %s13
      %p194 = scmp.lt.s32.totalorder %s13, 3
      %p195 = pnand %p193, %p194
      %p196 = pneg %p195
      // Predicated region
      $region33: #{patch_embed_forward.1} parent=5 // pred_check
        _
      $region34: #{patch_embed_forward.1} parent=5 // pred_check_branch
        %198 = sbr.rel (%p195) target = $region36
      $region35: #{patch_embed_forward.1} parent=5 // pred_region
        %s199 = ssub.s32 %s13, 1
        %p200 = scmp.lt.s32.totalorder %s23, 1
        %s201 = scalar_select %p200, %s23, 1
        %p202 = scmp.lt.s32.totalorder %s22, 0
        %s203 = scalar_select %p202, %s22, 0
        %s204 = smul.addr %s203, 2
        %s205 = smul.addr %s201, 2
        %s206 = sadd.s32 %s204, %s205
        %s207 = smul.addr %s206, 4
        %s208 = scalar_lea.vmem %s0, %s207
        %p209 = pneg %p53
        %p210 = pneg %p50
        %p211 = pneg %p74
        %p212 = pneg %p71
        %p213 = pneg %p95
        %p214 = pneg %p92
        %p215 = scmp.lt.s32.totalorder %s22, 0
        %s216 = scalar_select %p215, %s22, 0
        %s217 = smul.addr %s216, 4
        %s218 = scalar_lea.vmem %s3, %s217
        %p219 = pneg %p121
        %p220 = pneg %p118
        %p221 = pneg %p149
        %p222 = pneg %p146
        %s223 = sand.u32 %s136, 1
        %s224 = scalar_lea.sflag [#allocation3], %s223
        %s225 = sand.u32 %s136, 1
        %s226 = smul.addr %s225, 4
        %s227 = scalar_lea.vmem [#allocation2], %s226
        %p228 = scmp.lt.s32.totalorder %s23, 1
        %s229 = scalar_select %p228, %s23, 1
        %p230 = scmp.lt.s32.totalorder %s22, 0
        %s231 = scalar_select %p230, %s22, 0
        %s232 = smul.addr %s231, 2
        %s233 = smul.addr %s229, 2
        %s234 = sadd.s32 %s232, %s233
        %s235 = smul.addr %s234, 4
        %s236 = scalar_lea.vmem %s0, %s235
        %p237 = scmp.lt.s32.totalorder %s22, 0
        %s238 = scalar_select %p237, %s22, 0
        %s239 = smul.addr %s238, 4
        %s240 = scalar_lea.vmem %s3, %s239
        %v241 = vld [vmem:[%s236] sm:$0xff]
        %v242 = vld [vmem:[%s1] sm:$0xff]
        %v243 = vld [vmem:[%s1 + $0x8] sm:$0xff]
        %v244 = vld [vmem:[%s1 + $0x10] sm:$0xff]
        %v245 = vld [vmem:[%s1 + $0x18] sm:$0xff]
        %v246 = vld [vmem:[%s1 + $0x20] sm:$0xff]
        %v247 = vld [vmem:[%s1 + $0x28] sm:$0xff]
        %v248 = vld [vmem:[%s1 + $0x30] sm:$0xff]
        %v249 = vld [vmem:[%s1 + $0x38] sm:$0xff]
        %v250 = vld [vmem:[%s1 + $0x40] sm:$0xff]
        %v251 = vld [vmem:[%s1 + $0x48] sm:$0xff]
        %v252 = vld [vmem:[%s1 + $0x50] sm:$0xff]
        %v253 = vld [vmem:[%s1 + $0x58] sm:$0xff]
        %v254 = vld [vmem:[%s1 + $0x60] sm:$0xff]
        %v255 = vld [vmem:[%s1 + $0x68] sm:$0xff]
        %v256 = vld [vmem:[%s1 + $0x70] sm:$0xff]
        %v257 = vld [vmem:[%s1 + $0x78] sm:$0xff]
        %v258 = vld [vmem:[%s1 + $0x80] sm:$0xff]
        %v259 = vld [vmem:[%s1 + $0x88] sm:$0xff]
        %v260 = vld [vmem:[%s1 + $0x90] sm:$0xff]
        %v261 = vld [vmem:[%s1 + $0x98] sm:$0xff]
        %v262 = vld [vmem:[%s1 + $0xa0] sm:$0xff]
        %v263 = vld [vmem:[%s1 + $0xa8] sm:$0xff]
        %v264 = vld [vmem:[%s1 + $0xb0] sm:$0xff]
        %v265 = vld [vmem:[%s1 + $0xb8] sm:$0xff]
        %v266 = vld [vmem:[%s1 + $0xc0] sm:$0xff]
        %v267 = vld [vmem:[%s1 + $0xc8] sm:$0xff]
        %v268 = vld [vmem:[%s1 + $0xd0] sm:$0xff]
        %v269 = vld [vmem:[%s1 + $0xd8] sm:$0xff]
        %v270 = vld [vmem:[%s1 + $0xe0] sm:$0xff]
        %v271 = vld [vmem:[%s1 + $0xe8] sm:$0xff]
        %v272 = vld [vmem:[%s1 + $0xf0] sm:$0xff]
        %v273 = vld [vmem:[%s1 + $0xf8] sm:$0xff]
        %v274 = vld [vmem:[%s2] sm:$0x1]
        %v276 = vlaneseq
        %v277 = vshrl.u32 %v276, 7
        %v278 = vsub.s32 0, %v277
        %v279 = vrot.slane %v274, %v278
        %v282 = vcombine.high %v241, %v241
        %284 = vmatprep.subr.mxu0 0.0
        %285 = vmatpush1.msra.mxu0 %v242
        %286 = vmatprep.subr.mxu0 0.0
        %287 = vmatpush1.msra.mxu0 %v243
        %288 = vmatprep.subr.mxu0 0.0
        %289 = vmatpush1.msra.mxu0 %v244
        %290 = vmatprep.subr.mxu0 0.0
        %291 = vmatpush1.msra.mxu0 %v245
        %292 = vmatprep.subr.mxu0 0.0
        %293 = vmatpush1.msra.mxu0 %v246
        %294 = vmatprep.subr.mxu0 0.0
        %295 = vmatpush1.msra.mxu0 %v247
        %296 = vmatprep.subr.mxu0 0.0
        %297 = vmatpush1.msra.mxu0 %v248
        %298 = vmatprep.subr.mxu0 0.0
        %299 = vmatpush1.msra.mxu0 %v249
        %300 = vmatprep.subr.mxu0 0.0
        %301 = vmatpush1.msra.mxu0 %v250
        %302 = vmatprep.subr.mxu0 0.0
        %303 = vmatpush1.msra.mxu0 %v251
        %304 = vmatprep.subr.mxu0 0.0
        %305 = vmatpush1.msra.mxu0 %v252
        %306 = vmatprep.subr.mxu0 0.0
        %307 = vmatpush1.msra.mxu0 %v253
        %308 = vmatprep.subr.mxu0 0.0
        %309 = vmatpush1.msra.mxu0 %v254
        %310 = vmatprep.subr.mxu0 0.0
        %311 = vmatpush1.msra.mxu0 %v255
        %312 = vmatprep.subr.mxu0 0.0
        %313 = vmatpush1.msra.mxu0 %v256
        %314 = vmatprep.subr.mxu0 0.0
        %315 = vmatpush1.msra.mxu0 %v257
        %316 = vmatprep.subr.mxu0 0.0
        %317 = vmatpush1.msra.mxu0 %v258
        %318 = vmatprep.subr.mxu0 0.0
        %319 = vmatpush1.msra.mxu0 %v259
        %320 = vmatprep.subr.mxu0 0.0
        %321 = vmatpush1.msra.mxu0 %v260
        %322 = vmatprep.subr.mxu0 0.0
        %323 = vmatpush1.msra.mxu0 %v261
        %324 = vmatprep.subr.mxu0 0.0
        %325 = vmatpush1.msra.mxu0 %v262
        %326 = vmatprep.subr.mxu0 0.0
        %327 = vmatpush1.msra.mxu0 %v263
        %328 = vmatprep.subr.mxu0 0.0
        %329 = vmatpush1.msra.mxu0 %v264
        %330 = vmatprep.subr.mxu0 0.0
        %331 = vmatpush1.msra.mxu0 %v265
        %332 = vmatprep.subr.mxu0 0.0
        %333 = vmatpush1.msra.mxu0 %v266
        %334 = vmatprep.subr.mxu0 0.0
        %335 = vmatpush1.msra.mxu0 %v267
        %336 = vmatprep.subr.mxu0 0.0
        %337 = vmatpush1.msra.mxu0 %v268
        %338 = vmatprep.subr.mxu0 0.0
        %339 = vmatpush1.msra.mxu0 %v269
        %340 = vmatprep.subr.mxu0 0.0
        %341 = vmatpush1.msra.mxu0 %v270
        %342 = vmatprep.subr.mxu0 0.0
        %343 = vmatpush1.msra.mxu0 %v271
        %344 = vmatprep.subr.mxu0 0.0
        %345 = vmatpush1.msra.mxu0 %v272
        %346 = vmatprep.subr.mxu0 0.0
        %347 = vmatpush1.msra.mxu0 %v273
        %348 = vmatprep.mubr.f32.mxu0 %v282
        %349 = vmatmul.mubr.f32.gmra.mrb[0].mxu0 %v241
        %v350 = vpop.f32.mrb[0].mxu0
        %v351 = vadd.f32 %v279, %v350
        %v352 = vpop.f32.mrb[0].mxu0
        %353 = vdwg.mxu0
        %v354 = vld [vmem:[%s240] sm:$0xf]
        %v355 = vadd.f32 %v351, %v354
        %vm356 = vcmask 257024
        %357 = vst.msk [vmem:[%s227] sm:$0xf] %vm356, %v355
        %s358 = sand.u32 %s136, 1
        %s359 = scalar_lea.sflag [#allocation3], %s358
        %s360 = sand.u32 %s136, 1
        %s361 = smul.addr %s360, 4
        %s362 = scalar_lea.vmem [#allocation2], %s361
        // Predicated region
        $region37: #{patch_embed_forward.1} parent=35 // pred_check
          %p363 = pneg %p146
        $region38: #{patch_embed_forward.1} parent=35 // pred_check_branch
          %365 = sbr.rel (%p363) target = $region40
        $region39: #{patch_embed_forward.1} parent=35 // pred_region
          %s367 = ssub.s32 64, 64
          %368 = vsyncadd %s359, %s367
          %s369 = sadd.s32 %s22, %s23
          %s370 = smul.addr %s369, 64
          %s371 = scalar_lea.hbm %s4, %s370
          %s373 = sshll.u32 %s362, 4
          %s374 = int_to_ptr.vmem [resolvable:$true] %s373
          %376 = dma.vmem_to_hbm [thread:$0]  %s374, 64, %s371, %s359
        $region40: #{patch_embed_forward.1} parent=35 // pred_fallthru
          _
      $region36: #{patch_embed_forward.1} parent=5 // pred_fallthru
        _
      %p377 = scmp.le.s32.totalorder 2, %s13
      // Predicated region
      $region41: #{patch_embed_forward.1} parent=5 // pred_check
        %p378 = pneg %p377
      $region42: #{patch_embed_forward.1} parent=5 // pred_check_branch
        %380 = sbr.rel (%p378) target = $region44
      $region43: #{patch_embed_forward.1} parent=5 // pred_region
        %s381 = ssub.s32 %s13, 2
        // Predicated region
        $region45: #{patch_embed_forward.1} parent=43 // pred_check
          %p382 = pneg %p152
        $region46: #{patch_embed_forward.1} parent=43 // pred_check_branch
          %384 = sbr.rel (%p382) target = $region48
        $region47: #{patch_embed_forward.1} parent=43 // pred_region
          %s385 = sand.u32 %s137, 1
          %s386 = scalar_lea.sflag [#allocation3], %s385
          %s387 = sand.u32 %s137, 1
          %s388 = smul.addr %s387, 4
          %s389 = scalar_lea.vmem [#allocation2], %s388
          %390 = dma.done %s386, 64
        $region48: #{patch_embed_forward.1} parent=43 // pred_fallthru
          _
      $region44: #{patch_embed_forward.1} parent=5 // pred_fallthru
        _
    $region6: #{patch_embed_forward.1} parent=1 // loop_footer
      %s17 = sadd.s32 1, %s13
    $region7: #{patch_embed_forward.1} parent=1 // loop_footer_branch
      %12 = sbr.rel target = $region3
    $region8: #{patch_embed_forward.1} parent=1 // loop_exit
      _
    %391 = vsyncpa [#allocation3], 1
    %s392 = scalar_lea.sflag [#allocation3], 1
    %393 = vsyncpa %s392, 1

</llo_original>
